<compile_context>
chip_gen: v7x
topology: tpu7x:2x2x1
jax: 0.10.0
libtpu: 0.0.40
codegen_flags: <defaults>
</compile_context>

<pallas_src>
import functools

import jax
import jax.numpy as jnp
from jax.experimental import pallas as pl
from jax.experimental.pallas import tpu as pltpu


def _round_up(x, m):
    return ((x + m - 1) // m) * m


def _largest_divisor_tile(dim, unit, cap):
    """Largest multiple of `unit` that divides `dim` (dim % unit == 0) and is <= cap.
    Falls back to `unit` if no divisor fits under cap."""
    n = dim // unit
    best = 1
    d = 1
    while d * d <= n:
        if n % d == 0:
            for cand in (d, n // d):
                if cand * unit <= cap and cand > best:
                    best = cand
        d += 1
    return best * unit


def _promote_operands(xv, wv):
    if wv.dtype != xv.dtype:
        wide = jnp.promote_types(wv.dtype, xv.dtype)
        xv = xv.astype(wide)
        wv = wv.astype(wide)
    return xv, wv


def _linear_lrelu_kernel_acc_out(x_ref, w_ref, b_ref, o_ref, *, negative_slope):
    """f32-output variant: accumulate directly into the (VMEM-resident) output tile."""
    k = pl.program_id(2)

    @pl.when(k == 0)
    def _():
        o_ref[...] = jnp.zeros_like(o_ref)

    xv, wv = _promote_operands(x_ref[...], w_ref[...])
    o_ref[...] += jnp.dot(xv, wv, preferred_element_type=jnp.float32)

    @pl.when(k == pl.num_programs(2) - 1)
    def _():
        y = o_ref[...] + b_ref[...]
        o_ref[...] = jnp.where(y > 0, y, negative_slope * y)


def _linear_lrelu_kernel_scratch(x_ref, w_ref, b_ref, o_ref, acc_ref, *, negative_slope):
    """Generic variant (non-f32 output): f32 scratch accumulator + cast on epilogue."""
    k = pl.program_id(2)

    @pl.when(k == 0)
    def _():
        acc_ref[...] = jnp.zeros_like(acc_ref)

    xv, wv = _promote_operands(x_ref[...], w_ref[...])
    acc_ref[...] += jnp.dot(xv, wv, preferred_element_type=jnp.float32)

    @pl.when(k == pl.num_programs(2) - 1)
    def _():
        y = acc_ref[...] + b_ref[...]
        o_ref[...] = jnp.where(y > 0, y, negative_slope * y).astype(o_ref.dtype)


_BF16_WEIGHT_THRESHOLD = 512 * 512  # elements; above this default weight storage = bf16


def prepare_params(w_t, b, *, weight_dtype=None):
    """Pad / cast parameters ONCE (hoisted out of the per-call path).

    w_t: (IN, OUT)  -- transposed PyTorch weight (weight.T)
    b:   (OUT,)
    """
    IN, OUT = w_t.shape
    assert b.shape == (OUT,)
    if weight_dtype is None:
        weight_dtype = jnp.bfloat16 if IN * OUT >= _BF16_WEIGHT_THRESHOLD else jnp.float32
    Kp = _round_up(IN, 128)   # lane-dense pad only (exact: zero pad)
    Np = _round_up(OUT, 128)
    wp = jnp.zeros((Kp, Np), weight_dtype).at[:IN, :OUT].set(w_t.astype(weight_dtype))
    bp = jnp.zeros((1, Np), jnp.float32).at[0, :OUT].set(b.astype(jnp.float32))
    return {"w": wp, "b": bp, "in_features": IN, "out_features": OUT}


def fully_connect_modul_301_forward(
    x,
    params,
    *,
    negative_slope=0.05,
    tm_max=1024,   # single M tile for typical batch sizes -> W streamed from HBM once
    tn_max=512,    # can be raised to ~1024 on v6e (vmem_limit is derived below)
    tk_max=512,
    use_pallas=None,
):
    """x: (B, IN) -> LeakyReLU(x @ W^T + b), shape (B, OUT)."""
    wp, bp = params["w"], params["b"]
    IN, OUT = params["in_features"], params["out_features"]
    B, in_x = x.shape
    assert in_x == IN
    out_dtype = x.dtype
    Kp, Np = wp.shape

    # Tiny problems: launch/pad overhead dominates; XLA's fused path wins on all gens.
    if use_pallas is None:
        use_pallas = (B * IN * OUT) >= (1 << 18)
    if not use_pallas:
        y = jnp.dot(x, wp[:IN, :OUT].astype(x.dtype),
                    preferred_element_type=jnp.float32) + bp[0, :OUT]
        y = jnp.where(y > 0, y, negative_slope * y)
        return y.astype(out_dtype)

    # --- tile selection -----------------------------------------------------
    # M: sublane-aligned (16 if activations are sub-32-bit, else 8).
    m_align = 8 if jnp.dtype(x.dtype).itemsize >= 4 else 16
    Mp = _round_up(B, m_align)
    tm = Mp if Mp <= tm_max else _largest_divisor_tile(Mp, m_align, tm_max)
    # N / K: multiples of 128 that divide the (128-padded) dims exactly.
    tn = _largest_divisor_tile(Np, 128, tn_max)
    tk = _largest_divisor_tile(Kp, 128, tk_max)

    # v7x megacore: make sure at least one "parallel" axis has >= 2 blocks.
    if (Mp // tm) == 1 and (Np // tn) == 1 and Np >= 256:
        tn = _largest_divisor_tile(Np, 128, Np // 2)

    grid = (Mp // tm, Np // tn, Kp // tk)

    # --- activation pad (exact; no-op for aligned shapes) ---------------------
    if (B, IN) != (Mp, Kp):
        xp = jnp.zeros((Mp, Kp), x.dtype).at[:B, :IN].set(x)
    else:
        xp = x

    # --- VMEM budget (double buffers on inputs/outputs + optional scratch) ----
    x_bytes = jnp.dtype(xp.dtype).itemsize
    w_bytes = jnp.dtype(wp.dtype).itemsize
    need = 2 * (tm * tk * x_bytes + tk * tn * w_bytes + tn * 4 + tm * tn * 4) + tm * tn * 4
    vmem_limit = min(max(int(need * 1.5) + (2 << 20), 16 << 20), 40 << 20)

    f32_out = jnp.dtype(out_dtype) == jnp.float32
    kernel = functools.partial(
        _linear_lrelu_kernel_acc_out if f32_out else _linear_lrelu_kernel_scratch,
        negative_slope=negative_slope,
    )
    scratch = [] if f32_out else [pltpu.VMEM((tm, tn), jnp.float32)]

    out_padded = pl.pallas_call(
        kernel,
        out_shape=jax.ShapeDtypeStruct((Mp, Np), out_dtype),
        grid=grid,
        in_specs=[
            pl.BlockSpec((tm, tk), lambda i, j, k: (i, k)),   # x tile
            pl.BlockSpec((tk, tn), lambda i, j, k: (k, j)),   # W tile
            pl.BlockSpec((1, tn), lambda i, j, k: (0, j)),    # bias tile
        ],
        out_specs=pl.BlockSpec((tm, tn), lambda i, j, k: (i, j)),
        scratch_shapes=scratch,
        compiler_params=pltpu.CompilerParams(
            dimension_semantics=("parallel", "parallel", "arbitrary"),
            vmem_limit_bytes=vmem_limit,
        ),
    )(xp, wp, bp)

    if (Mp, Np) == (B, OUT):
        return out_padded
    return out_padded[:B, :OUT]


def init_params(key, size_in, size_out):
    """Matches Layer_06.reset_parameters(): weight ~ U(-lim, lim) with
    lim = 1/sqrt(weight.size(0)) = 1/sqrt(out_features), bias = 0.
    PyTorch weight is (OUT, IN); we store its transpose (IN, OUT)."""
    lim = 1.0 / jnp.sqrt(jnp.float32(size_out))
    w = jax.random.uniform(key, (size_out, size_in), jnp.float32, minval=-lim, maxval=lim)
    return w.T, jnp.zeros((size_out,), jnp.float32)


if __name__ == "__main__":
    # Small shapes consistent with the module: Size = (IN=32, OUT=64), batch = 8.
    SIZE = (32, 64)
    B = 8

    key = jax.random.PRNGKey(0)
    kx, kw, kx2, kw2, kb2 = jax.random.split(key, 5)

    x = jax.random.normal(kx, (B, SIZE[0]), jnp.float32)
    w_t, b = init_params(kw, SIZE[0], SIZE[1])
    params = prepare_params(w_t, b)  # small weight -> f32 storage

    ref = x @ w_t + b
    ref = jnp.where(ref > 0, ref, 0.05 * ref)

    # Default dispatch: tiny shape goes through the fused jnp path.
    out = jax.block_until_ready(fully_connect_modul_301_forward(x, params))
    assert out.shape == (B, SIZE[1])
    assert jnp.allclose(out, ref, atol=1e-5, rtol=1e-5)

    # Force the Pallas kernel on the same small shape (kernel-path correctness).
    out_pk = jax.block_until_ready(
        fully_connect_modul_301_forward(x, params, use_pallas=True)
    )
    assert out_pk.shape == (B, SIZE[1])
    assert jnp.allclose(out_pk, ref, atol=1e-4, rtol=1e-4)

    # Medium shape: exercises 128-only padding (IN=520 -> Kp=640), divisor tiles,
    # multi-step K accumulation, the megacore N split, and nonzero bias.
    B2, IN2, OUT2 = 40, 520, 384
    x2 = jax.random.normal(kx2, (B2, IN2), jnp.float32)
    w2_t, _ = init_params(kw2, IN2, OUT2)
    b2 = 0.1 * jax.random.normal(kb2, (OUT2,), jnp.float32)
    ref2 = x2 @ w2_t + b2
    ref2 = jnp.where(ref2 > 0, ref2, 0.05 * ref2)

    params2 = prepare_params(w2_t, b2, weight_dtype=jnp.float32)  # tight check
    out2 = jax.block_until_ready(fully_connect_modul_301_forward(x2, params2))
    assert out2.shape == (B2, OUT2)
    assert jnp.allclose(out2, ref2, atol=1e-3, rtol=1e-3)

    # bf16-weight storage (default for large layers): looser tolerance from W rounding.
    params2_bf16 = prepare_params(w2_t, b2, weight_dtype=jnp.bfloat16)
    out2_bf16 = jax.block_until_ready(fully_connect_modul_301_forward(x2, params2_bf16))
    assert out2_bf16.shape == (B2, OUT2)
    assert jnp.allclose(out2_bf16, ref2, atol=5e-2, rtol=5e-2)

    print("KERNEL_OK")
</pallas_src>

<mosaic_0001>
module attributes {stable_mosaic.version = 11 : i64} {
  func.func @_linear_lrelu_kernel_acc_out(%arg0: i32, %arg1: i32, %arg2: i32, %arg3: memref<8x128xf32, #tpu.memory_space<vmem>>, %arg4: memref<128x128xf32, #tpu.memory_space<vmem>>, %arg5: memref<1x128xf32, #tpu.memory_space<vmem>>, %arg6: memref<8x128xf32, #tpu.memory_space<vmem>>) attributes {dimension_semantics = [#tpu.dimension_semantics<parallel>, #tpu.dimension_semantics<parallel>, #tpu.dimension_semantics<arbitrary>], iteration_bounds = array<i64: 1, 1, 1>, scalar_prefetch = 0 : i64, scratch_operands = 0 : i64, tpu.core_type = #tpu.core_type<tc>, window_params = [{transform_indices = @transform_0, window_bounds = array<i64: 8, 128>}, {transform_indices = @transform_1, window_bounds = array<i64: 128, 128>}, {transform_indices = @transform_2, window_bounds = array<i64: 1, 128>}, {transform_indices = @transform_3, window_bounds = array<i64: 8, 128>}]} {
    %c0_i32 = arith.constant 0 : i32
    %0 = arith.cmpi eq, %arg2, %c0_i32 : i32
    %1 = arith.extui %0 : i1 to i32
    %c0_i32_0 = arith.constant 0 : i32
    %2 = arith.cmpi ne, %1, %c0_i32_0 : i32
    scf.if %2 {
      %cst_10 = arith.constant 0.000000e+00 : f32
      %12 = vector.broadcast %cst_10 : f32 to vector<8x128xf32>
      %c0_11 = arith.constant 0 : index
      %c0_12 = arith.constant 0 : index
      %13 = vector.load %arg6[%c0_11, %c0_12] : memref<8x128xf32, #tpu.memory_space<vmem>>, vector<8x128xf32>
      tpu.vector_store %arg6[%c0_11, %c0_12], %12 {strides = array<i32>} : memref<8x128xf32, #tpu.memory_space<vmem>>, vector<8x128xf32>,
    } else {
    }
    %c0 = arith.constant 0 : index
    %c0_1 = arith.constant 0 : index
    %3 = vector.load %arg3[%c0, %c0_1] : memref<8x128xf32, #tpu.memory_space<vmem>>, vector<8x128xf32>
    %c0_2 = arith.constant 0 : index
    %c0_3 = arith.constant 0 : index
    %4 = vector.load %arg4[%c0_2, %c0_3] : memref<128x128xf32, #tpu.memory_space<vmem>>, vector<128x128xf32>
    %c0_4 = arith.constant 0 : index
    %c0_5 = arith.constant 0 : index
    %5 = vector.load %arg6[%c0_4, %c0_5] : memref<8x128xf32, #tpu.memory_space<vmem>>, vector<8x128xf32>
    %cst = arith.constant dense<0.000000e+00> : vector<8x128xf32>
    %6 = tpu.matmul %3, %4, %cst {dimension_numbers = #tpu.dot_dimension_numbers<[1], [0], [0], [1], [0, 0, 1, 1], [], []>} : vector<8x128xf32>, vector<128x128xf32>, vector<8x128xf32> -> vector<8x128xf32>
    %7 = arith.addf %5, %6 : vector<8x128xf32>
    %c0_6 = arith.constant 0 : index
    %c0_7 = arith.constant 0 : index
    %8 = vector.load %arg6[%c0_6, %c0_7] : memref<8x128xf32, #tpu.memory_space<vmem>>, vector<8x128xf32>
    tpu.vector_store %arg6[%c0_6, %c0_7], %7 {strides = array<i32>} : memref<8x128xf32, #tpu.memory_space<vmem>>, vector<8x128xf32>,
    %c0_i32_8 = arith.constant 0 : i32
    %9 = arith.cmpi eq, %arg2, %c0_i32_8 : i32
    %10 = arith.extui %9 : i1 to i32
    %c0_i32_9 = arith.constant 0 : i32
    %11 = arith.cmpi ne, %10, %c0_i32_9 : i32
    scf.if %11 {
      %c0_10 = arith.constant 0 : index
      %c0_11 = arith.constant 0 : index
      %12 = vector.load %arg6[%c0_10, %c0_11] : memref<8x128xf32, #tpu.memory_space<vmem>>, vector<8x128xf32>
      %c0_12 = arith.constant 0 : index
      %c0_13 = arith.constant 0 : index
      %13 = vector.load %arg5[%c0_12, %c0_13] : memref<1x128xf32, #tpu.memory_space<vmem>>, vector<1x128xf32>
      %14 = vector.broadcast %13 : vector<1x128xf32> to vector<8x128xf32>
      %15 = arith.addf %12, %14 : vector<8x128xf32>
      %cst_14 = arith.constant 0.000000e+00 : f32
      %16 = vector.broadcast %cst_14 : f32 to vector<8x128xf32>
      %17 = arith.cmpf ogt, %15, %16 : vector<8x128xf32>
      %cst_15 = arith.constant 5.000000e-02 : f32
      %18 = vector.broadcast %cst_15 : f32 to vector<8x128xf32>
      %19 = arith.mulf %18, %15 : vector<8x128xf32>
      %20 = arith.select %17, %15, %19 : vector<8x128xi1>, vector<8x128xf32>
      %c0_16 = arith.constant 0 : index
      %c0_17 = arith.constant 0 : index
      %21 = vector.load %arg6[%c0_16, %c0_17] : memref<8x128xf32, #tpu.memory_space<vmem>>, vector<8x128xf32>
      tpu.vector_store %arg6[%c0_16, %c0_17], %20 {strides = array<i32>} : memref<8x128xf32, #tpu.memory_space<vmem>>, vector<8x128xf32>,
    } else {
    }
    return
  }
  func.func @transform_0(%arg0: i32, %arg1: i32, %arg2: i32) -> (i32, i32) {
    %c0_i32 = arith.constant 0 : i32
    return %arg0, %arg2 : i32, i32
  }
  func.func @transform_1(%arg0: i32, %arg1: i32, %arg2: i32) -> (i32, i32) {
    %c0_i32 = arith.constant 0 : i32
    return %arg2, %arg1 : i32, i32
  }
  func.func @transform_2(%arg0: i32, %arg1: i32, %arg2: i32) -> (i32, i32) {
    %c0_i32 = arith.constant 0 : i32
    %c0_i32_0 = arith.constant 0 : i32
    return %c0_i32, %arg1 : i32, i32
  }
  func.func @transform_3(%arg0: i32, %arg1: i32, %arg2: i32) -> (i32, i32) {
    %c0_i32 = arith.constant 0 : i32
    return %arg0, %arg1 : i32, i32
  }
}

</mosaic_0001>

<llo_original>
// kernel: tpu_custom_call.1
$region0: #{tpu_custom_call.1}
  #allocation0 [shape = 'u32[]', space=smem, size = 0x4, offset = 0x4, fixed_abs, tag = 'smem constant byte address 0x4 - core index']
  #allocation1 [shape = 'u32[144,128]{1,0:T(1,128)}', space=vmem, size = 0x12000, scoped, tag = 'internal scratch']
  %s0 = inlined_call_operand.hbm [shape: f32[8,128], index: 0, kind: input, shape index: {}]
  %s1 = inlined_call_operand.hbm [shape: f32[128,128], index: 1, kind: input, shape index: {}]
  %s2 = inlined_call_operand.vmem [shape: f32[1,128], index: 2, kind: input, shape index: {}]
  %s3 = inlined_call_operand.hbm [shape: f32[8,128], index: 3, kind: output, shape index: {}]
  %s4 = sld [smem:[#allocation0]]
  $region38: #{tpu_custom_call.1} parent=0
    _
  %s6 = ssub.s32 1, %s4
  %s7 = scalar_select 0, %s6, %s4
  $region1: #{tpu_custom_call.1} parent=0
    #allocation2 [shape = 'u8[4096]{0}', space=vmem, size = 0x1000, scoped, tag = 'input window, operand 0, single buffered']
    #allocation3 [shape = 's32[1]{0}', space=sflag, size = 0x4, scoped, tag = 'scoped memory for tpu_custom_call.1']
    #allocation4 [shape = 's32[1]{0}', space=sflag, size = 0x4, scoped, tag = 'scoped memory for tpu_custom_call.1']
    #allocation5 [shape = 'u8[65536]{0}', space=vmem, size = 0x10000, scoped, tag = 'input window, operand 1, single buffered']
    #allocation6 [shape = 's32[1]{0}', space=sflag, size = 0x4, scoped, tag = 'scoped memory for tpu_custom_call.1']
    #allocation7 [shape = 'u8[4096]{0}', space=vmem, size = 0x1000, scoped, tag = 'output window, operand 0, single buffered']
    %8 = vsyncpa [#allocation3], 0
    %9 = vsyncpa [#allocation6], 0
    %10 = vsyncpa [#allocation4], 0
    // Predicated region
    $region2: #{tpu_custom_call.1} parent=1 // pred_check
      _
    $region3: #{tpu_custom_call.1} parent=1 // pred_check_branch
      %12 = sbr.rel (0) target = $region5
    $region4: #{tpu_custom_call.1} parent=1 // pred_region
      %s14 = ssub.s32 128, 128
      %15 = vsyncadd [#allocation3], %s14
      %s17 = sshll.u32 [#allocation2], 4
      %s18 = int_to_ptr.vmem [resolvable:$true] %s17
      %20 = dma.hbm_to_vmem [thread:$0]  %s0, 128, %s18, [#allocation3]
    $region5: #{tpu_custom_call.1} parent=1 // pred_fallthru
      _
    // Predicated region
    $region6: #{tpu_custom_call.1} parent=1 // pred_check
      _
    $region7: #{tpu_custom_call.1} parent=1 // pred_check_branch
      %22 = sbr.rel (0) target = $region9
    $region8: #{tpu_custom_call.1} parent=1 // pred_region
      %s24 = ssub.s32 2048, 2048
      %25 = vsyncadd [#allocation6], %s24
      %s26 = sshll.u32 [#allocation5], 4
      %s27 = int_to_ptr.vmem [resolvable:$true] %s26
      %32 = dma.hbm_to_vmem [thread:$0]  %s1, 2048, %s27, [#allocation6], 128, 128, 8
    $region9: #{tpu_custom_call.1} parent=1 // pred_fallthru
      _
    // Predicated region
    $region10: #{tpu_custom_call.1} parent=1 // pred_check
      _
    $region11: #{tpu_custom_call.1} parent=1 // pred_check_branch
      %34 = sbr.rel (0) target = $region13
    $region12: #{tpu_custom_call.1} parent=1 // pred_region
      _
    $region13: #{tpu_custom_call.1} parent=1 // pred_fallthru
      _
    // Predicated region
    $region14: #{tpu_custom_call.1} parent=1 // pred_check
      _
    $region15: #{tpu_custom_call.1} parent=1 // pred_check_branch
      %36 = sbr.rel (0) target = $region17
    $region16: #{tpu_custom_call.1} parent=1 // pred_region
      %37 = dma.done [#allocation3], 128
    $region17: #{tpu_custom_call.1} parent=1 // pred_fallthru
      _
    // Predicated region
    $region18: #{tpu_custom_call.1} parent=1 // pred_check
      _
    $region19: #{tpu_custom_call.1} parent=1 // pred_check_branch
      %39 = sbr.rel (0) target = $region21
    $region20: #{tpu_custom_call.1} parent=1 // pred_region
      %40 = dma.done [#allocation6], 2048
    $region21: #{tpu_custom_call.1} parent=1 // pred_fallthru
      _
    %p41 = scmp.eq.s32.totalorder 0, 0
    // Predicated region
    $region22: #{tpu_custom_call.1} parent=1 // pred_check
      %p42 = pneg %p41
    $region23: #{tpu_custom_call.1} parent=1 // pred_check_branch
      %44 = sbr.rel (%p42) target = $region25
    $region24: #{tpu_custom_call.1} parent=1 // pred_region
      %45 = vst [vmem:[#allocation7] sm:$0xff] 0.0
    $region25: #{tpu_custom_call.1} parent=1 // pred_fallthru
      _
    %v46 = vld [vmem:[#allocation2] sm:$0xff]
    %v47 = vld [vmem:[#allocation5] sm:$0xff]
    %v48 = vld [vmem:[#allocation5 + $0x8] sm:$0xff]
    %v49 = vld [vmem:[#allocation5 + $0x10] sm:$0xff]
    %v50 = vld [vmem:[#allocation5 + $0x18] sm:$0xff]
    %v51 = vld [vmem:[#allocation5 + $0x20] sm:$0xff]
    %v52 = vld [vmem:[#allocation5 + $0x28] sm:$0xff]
    %v53 = vld [vmem:[#allocation5 + $0x30] sm:$0xff]
    %v54 = vld [vmem:[#allocation5 + $0x38] sm:$0xff]
    %v55 = vld [vmem:[#allocation5 + $0x40] sm:$0xff]
    %v56 = vld [vmem:[#allocation5 + $0x48] sm:$0xff]
    %v57 = vld [vmem:[#allocation5 + $0x50] sm:$0xff]
    %v58 = vld [vmem:[#allocation5 + $0x58] sm:$0xff]
    %v59 = vld [vmem:[#allocation5 + $0x60] sm:$0xff]
    %v60 = vld [vmem:[#allocation5 + $0x68] sm:$0xff]
    %v61 = vld [vmem:[#allocation5 + $0x70] sm:$0xff]
    %v62 = vld [vmem:[#allocation5 + $0x78] sm:$0xff]
    %v63 = vld [vmem:[#allocation7] sm:$0xff]
    %64 = vmatprep.subr.mxu0 0.0
    %65 = vmatpush1.msra.mxu0 %v47
    %66 = vmatprep.subr.mxu0 0.0
    %67 = vmatpush1.msra.mxu0 %v48
    %68 = vmatprep.subr.mxu0 0.0
    %69 = vmatpush1.msra.mxu0 %v49
    %70 = vmatprep.subr.mxu0 0.0
    %71 = vmatpush1.msra.mxu0 %v50
    %72 = vmatprep.subr.mxu0 0.0
    %73 = vmatpush1.msra.mxu0 %v51
    %74 = vmatprep.subr.mxu0 0.0
    %75 = vmatpush1.msra.mxu0 %v52
    %76 = vmatprep.subr.mxu0 0.0
    %77 = vmatpush1.msra.mxu0 %v53
    %78 = vmatprep.subr.mxu0 0.0
    %79 = vmatpush1.msra.mxu0 %v54
    %80 = vmatprep.subr.mxu0 0.0
    %81 = vmatpush1.msra.mxu0 %v55
    %82 = vmatprep.subr.mxu0 0.0
    %83 = vmatpush1.msra.mxu0 %v56
    %84 = vmatprep.subr.mxu0 0.0
    %85 = vmatpush1.msra.mxu0 %v57
    %86 = vmatprep.subr.mxu0 0.0
    %87 = vmatpush1.msra.mxu0 %v58
    %88 = vmatprep.subr.mxu0 0.0
    %89 = vmatpush1.msra.mxu0 %v59
    %90 = vmatprep.subr.mxu0 0.0
    %91 = vmatpush1.msra.mxu0 %v60
    %92 = vmatprep.subr.mxu0 0.0
    %93 = vmatpush1.msra.mxu0 %v61
    %94 = vmatprep.subr.mxu0 0.0
    %95 = vmatpush1.msra.mxu0 %v62
    %96 = vmatprep.subr.mxu0 0.0
    %97 = vmatpush1.msra.mxu0 0.0
    %98 = vmatprep.subr.mxu0 0.0
    %99 = vmatpush1.msra.mxu0 0.0
    %100 = vmatprep.subr.mxu0 0.0
    %101 = vmatpush1.msra.mxu0 0.0
    %102 = vmatprep.subr.mxu0 0.0
    %103 = vmatpush1.msra.mxu0 0.0
    %104 = vmatprep.subr.mxu0 0.0
    %105 = vmatpush1.msra.mxu0 0.0
    %106 = vmatprep.subr.mxu0 0.0
    %107 = vmatpush1.msra.mxu0 0.0
    %108 = vmatprep.subr.mxu0 0.0
    %109 = vmatpush1.msra.mxu0 0.0
    %110 = vmatprep.subr.mxu0 0.0
    %111 = vmatpush1.msra.mxu0 0.0
    %112 = vmatprep.subr.mxu0 0.0
    %113 = vmatpush1.msra.mxu0 0.0
    %114 = vmatprep.subr.mxu0 0.0
    %115 = vmatpush1.msra.mxu0 0.0
    %116 = vmatprep.subr.mxu0 0.0
    %117 = vmatpush1.msra.mxu0 0.0
    %118 = vmatprep.subr.mxu0 0.0
    %119 = vmatpush1.msra.mxu0 0.0
    %120 = vmatprep.subr.mxu0 0.0
    %121 = vmatpush1.msra.mxu0 0.0
    %122 = vmatprep.subr.mxu0 0.0
    %123 = vmatpush1.msra.mxu0 0.0
    %124 = vmatprep.subr.mxu0 0.0
    %125 = vmatpush1.msra.mxu0 0.0
    %126 = vmatprep.subr.mxu0 0.0
    %127 = vmatpush1.msra.mxu0 0.0
    %128 = vmatprep.mubr.f32.mxu0 0.0
    %129 = vmatmul.mubr.f32.gmra.mrb[0].mxu0 %v46
    %v130 = vpop.f32.mrb[0].mxu0
    %v131 = vadd.f32 0.0, %v130
    %v132 = vpop.f32.mrb[0].mxu0
    %133 = vdwg.mxu0
    %v134 = vadd.f32 %v63, %v131
    %135 = vst [vmem:[#allocation7] sm:$0xff] %v134
    // Predicated region
    $region26: #{tpu_custom_call.1} parent=1 // pred_check
      %p136 = pneg %p41
    $region27: #{tpu_custom_call.1} parent=1 // pred_check_branch
      %138 = sbr.rel (%p136) target = $region29
    $region28: #{tpu_custom_call.1} parent=1 // pred_region
      %v139 = vld [vmem:[#allocation7] sm:$0xff]
      %v140 = vld [vmem:[%s2] sm:$0x1]
      %v142 = vlaneseq
      %v143 = vshrl.u32 %v142, 7
      %v144 = vsub.s32 0, %v143
      %v145 = vrot.slane %v140, %v144
      %v147 = vadd.f32 %v139, %v145
      %vm148 = vcmp.gt.f32.partialorder %v147, 0.0
      %v149 = vmul.f32 %v147, 0.05
      %v150 = vsel %vm148, %v147, %v149
      %151 = vst [vmem:[#allocation7] sm:$0xff] %v150
    $region29: #{tpu_custom_call.1} parent=1 // pred_fallthru
      _
    // Predicated region
    $region30: #{tpu_custom_call.1} parent=1 // pred_check
      _
    $region31: #{tpu_custom_call.1} parent=1 // pred_check_branch
      %153 = sbr.rel (0) target = $region33
    $region32: #{tpu_custom_call.1} parent=1 // pred_region
      %s155 = ssub.s32 128, 128
      %156 = vsyncadd [#allocation4], %s155
      %s158 = sshll.u32 [#allocation7], 4
      %s159 = int_to_ptr.vmem [resolvable:$true] %s158
      %161 = dma.vmem_to_hbm [thread:$0]  %s159, 128, %s3, [#allocation4]
    $region33: #{tpu_custom_call.1} parent=1 // pred_fallthru
      _
    // Predicated region
    $region34: #{tpu_custom_call.1} parent=1 // pred_check
      _
    $region35: #{tpu_custom_call.1} parent=1 // pred_check_branch
      %163 = sbr.rel (0) target = $region37
    $region36: #{tpu_custom_call.1} parent=1 // pred_region
      %164 = dma.done [#allocation4], 128
    $region37: #{tpu_custom_call.1} parent=1 // pred_fallthru
      _
    %165 = vsyncpa [#allocation3], 1
    %166 = vsyncpa [#allocation6], 1
    %167 = vsyncpa [#allocation4], 1

</llo_original>
